<compile_context>
chip_gen: v5e
topology: v5e:2x2
jax: 0.10.0
libtpu: 0.0.40
codegen_flags: <defaults>
</compile_context>

<pallas_src>
import functools

import jax
import jax.numpy as jnp
from jax import lax
from jax.experimental import pallas as pl
from jax.experimental.pallas import tpu as pltpu


# ----------------------------------------------------------------------------
# Tiled dense linear:  y = x @ Wt + b   (bf16 MXU inputs, f32 accumulation)
# ----------------------------------------------------------------------------
def _linear_kernel(x_ref, wt_ref, b_ref, o_ref, acc_ref):
    @pl.when(pl.program_id(2) == 0)
    def _():
        acc_ref[...] = jnp.zeros_like(acc_ref)

    acc_ref[...] += jnp.dot(
        x_ref[...], wt_ref[...], preferred_element_type=jnp.float32
    )

    @pl.when(pl.program_id(2) == pl.num_programs(2) - 1)
    def _():
        o_ref[...] = (acc_ref[...] + b_ref[...]).astype(o_ref.dtype)


def _pick_tile(dim, preferred, align):
    """Largest multiple-of-`align` divisor of `dim` that is <= preferred,
    else the full dim (allowed when the block equals the array extent)."""
    if dim % align == 0:
        t = min(preferred, dim)
        t = (t // align) * align
        while t >= align and dim % t != 0:
            t -= align
        if t >= align:
            return t
    return dim


def linear(x2d, wt, b_row, out_dtype=jnp.float32, tm=256, tn=256, tk=512):
    """x2d: (M, K) bf16, wt: (K, N) bf16 (pre-transposed), b_row: (1, N) f32."""
    M, K = x2d.shape
    _, N = wt.shape
    tm = _pick_tile(M, tm, 8)
    tn = _pick_tile(N, tn, 128)
    tk = _pick_tile(K, tk, 128)
    grid = (M // tm, N // tn, K // tk)
    return pl.pallas_call(
        _linear_kernel,
        out_shape=jax.ShapeDtypeStruct((M, N), out_dtype),
        grid=grid,
        in_specs=[
            pl.BlockSpec((tm, tk), lambda i, j, k: (i, k)),
            pl.BlockSpec((tk, tn), lambda i, j, k: (k, j)),
            pl.BlockSpec((1, tn), lambda i, j, k: (0, j)),
        ],
        out_specs=pl.BlockSpec((tm, tn), lambda i, j, k: (i, j)),
        scratch_shapes=[pltpu.VMEM((tm, tn), jnp.float32)],
        compiler_params=pltpu.CompilerParams(
            dimension_semantics=("parallel", "parallel", "arbitrary")
        ),
    )(x2d, wt, b_row)


# ----------------------------------------------------------------------------
# Per-batch interval-aware attention + output projection (fused)
#   str   = softmax(where(mask==0, -1e9, str_mat))   -- computed ONCE per batch
#   s_h   = (q_h @ k_h^T) * (1/d_h) + str
#   ctx   = concat_h( softmax(s_h) @ v_h )           -- (S, H*Dh) lane-dense
#   out   = ctx @ Wo^T + bo                          -- no HBM round trip
# ----------------------------------------------------------------------------
def _attn_kernel(q_ref, k_ref, v_ref, str_ref, mask_ref, wo_ref, bo_ref, o_ref):
    n_head = q_ref.shape[1]
    d_h = q_ref.shape[3]

    # Mask-fold + str softmax, shared by all heads (computed once per batch).
    sm = jnp.where(
        mask_ref[0, 0] == 0.0,
        jnp.float32(-1e9),
        str_ref[0, 0].astype(jnp.float32),
    )                                                            # (S, S) f32
    sm = sm - jnp.max(sm, axis=-1, keepdims=True)
    e_sm = jnp.exp(sm)
    sm = e_sm * pl.reciprocal(jnp.sum(e_sm, axis=-1, keepdims=True), approx=True)

    inv_dh = jnp.float32(1.0 / d_h)
    outs = []
    for h in range(n_head):                                      # static unroll
        qh = q_ref[0, h]                                         # (S, Dh) bf16
        kh = k_ref[0, h]
        vh = v_ref[0, h]

        # q @ k^T with no explicit transpose (contract last dims), f32 acc.
        s = lax.dot_general(
            qh, kh, (((1,), (1,)), ((), ())),
            preferred_element_type=jnp.float32,
        )                                                        # (S, S) f32
        s = s * inv_dh + sm
        # NOTE: reference's second masked_fill on scores is out-of-place and
        # its result is discarded -> intentionally a no-op here.
        s = s - jnp.max(s, axis=-1, keepdims=True)
        e = jnp.exp(s)
        p = e * pl.reciprocal(jnp.sum(e, axis=-1, keepdims=True), approx=True)
        # dropout(prob) is identity at inference.

        oh = jnp.dot(p.astype(jnp.bfloat16), vh,
                     preferred_element_type=jnp.float32)         # (S, Dh) f32
        outs.append(oh)

    # Lane-dense concatenated context in the transpose(1,2)+view layout,
    # immediately consumed by the output projection (Wo resident in VMEM).
    ctx = jnp.concatenate(outs, axis=-1).astype(jnp.bfloat16)    # (S, F) bf16
    o_ref[0] = (
        jnp.dot(ctx, wo_ref[...], preferred_element_type=jnp.float32)
        + bo_ref[...]
    ).astype(o_ref.dtype)


def attention_proj(q, k, v, str_mat, attn_mask, wo_t, bo):
    """q,k,v: (B, H, S, Dh) bf16; str_mat/attn_mask: (B, 1, S, S) f32;
    wo_t: (F, F) bf16 (pre-transposed); bo: (1, F) f32.
    Returns (B, S, F) f32 — the final module output."""
    B, H, S, Dh = q.shape
    F = H * Dh
    qkv_spec = pl.BlockSpec((1, H, S, Dh), lambda b: (b, 0, 0, 0))
    mat_spec = pl.BlockSpec((1, 1, S, S), lambda b: (b, 0, 0, 0))
    return pl.pallas_call(
        _attn_kernel,
        out_shape=jax.ShapeDtypeStruct((B, S, F), jnp.float32),
        grid=(B,),
        in_specs=[
            qkv_spec, qkv_spec, qkv_spec,
            mat_spec, mat_spec,
            pl.BlockSpec((F, F), lambda b: (0, 0)),   # Wo^T (constant -> no re-DMA)
            pl.BlockSpec((1, F), lambda b: (0, 0)),   # bo
        ],
        out_specs=pl.BlockSpec((1, S, F), lambda b: (b, 0, 0)),
        compiler_params=pltpu.CompilerParams(dimension_semantics=("parallel",)),
    )(q, k, v, str_mat, attn_mask, wo_t, bo)


# ----------------------------------------------------------------------------
# Parameter preparation (done once, off the hot path)
# ----------------------------------------------------------------------------
def prepare_params(params):
    w = [jnp.asarray(wi, jnp.float32) for wi in params["w"]]
    b = [jnp.asarray(bi, jnp.float32) for bi in params["b"]]
    # Fused QKV weight (Fin, 3F) in bf16; biases kept in f32.
    wqkv_t = jnp.concatenate([w[0].T, w[1].T, w[2].T], axis=1).astype(jnp.bfloat16)
    bqkv = jnp.concatenate([b[0], b[1], b[2]]).reshape(1, -1)
    wo_t = w[3].T.astype(jnp.bfloat16)
    bo = b[3].reshape(1, -1)
    return {"wqkv_t": wqkv_t, "bqkv": bqkv, "wo_t": wo_t, "bo": bo}


# ----------------------------------------------------------------------------
# Full module forward
# ----------------------------------------------------------------------------
def mh_inr_attn_forward(prepared, x, str_mat, attn_mask, n_head):
    B, S, F = x.shape
    d_h = F // n_head

    # Fused Q/K/V projection: x is read from HBM once, one pipelined matmul.
    x2d = x.reshape(B * S, F).astype(jnp.bfloat16)
    qkv = linear(x2d, prepared["wqkv_t"], prepared["bqkv"], out_dtype=jnp.bfloat16)

    # Row-major view(b, h, -1, d_h) == reshape(B, H, S, Dh) (reference semantics).
    q = qkv[:, :F].reshape(B, n_head, S, d_h)
    k = qkv[:, F:2 * F].reshape(B, n_head, S, d_h)
    v = qkv[:, 2 * F:].reshape(B, n_head, S, d_h)

    # Attention + output projection fused (mask folding done in-kernel).
    return attention_proj(
        q, k, v,
        str_mat.astype(jnp.float32),
        attn_mask.astype(jnp.float32),
        prepared["wo_t"], prepared["bo"],
    )


# ----------------------------------------------------------------------------
# Pure-JAX f32 reference (for sanity check)
# ----------------------------------------------------------------------------
def reference_forward(params, x, str_mat, attn_mask, n_head):
    B, S, F = x.shape
    d_h = F // n_head

    def lin(xx, w, b):
        return xx @ w.T + b

    q = lin(x, params["w"][0], params["b"][0]).reshape(B, n_head, S, d_h)
    k = lin(x, params["w"][1], params["b"][1]).reshape(B, n_head, S, d_h)
    v = lin(x, params["w"][2], params["b"][2]).reshape(B, n_head, S, d_h)

    sm = jnp.where(attn_mask == 0.0, -1e9, str_mat)
    sm = jax.nn.softmax(sm, axis=-1)
    scores = jnp.einsum("bhqd,bhkd->bhqk", q, k) / d_h + sm
    prob = jax.nn.softmax(scores, axis=-1)
    out = jnp.einsum("bhqk,bhkd->bhqd", prob, v)
    out = jnp.transpose(out, (0, 2, 1, 3)).reshape(B, S, F)
    return lin(out, params["w"][3], params["b"][3])


# ----------------------------------------------------------------------------
# Deterministic parameter init (nn.Linear-style uniform(-1/sqrt(fan), 1/sqrt(fan)))
# ----------------------------------------------------------------------------
def init_params(key, features):
    ws, bs = [], []
    bound = 1.0 / (features ** 0.5)
    for _ in range(4):
        kw, kb, key = jax.random.split(key, 3)
        ws.append(
            jax.random.uniform(kw, (features, features), jnp.float32, -bound, bound)
        )
        bs.append(jax.random.uniform(kb, (features,), jnp.float32, -bound, bound))
    return {"w": ws, "b": bs}


if __name__ == "__main__":
    B, S, FEAT, N_HEAD = 2, 8, 32, 4
    key = jax.random.PRNGKey(0)
    kp, kx, ks, km = jax.random.split(key, 4)

    params = init_params(kp, FEAT)
    prepared = prepare_params(params)

    x = jax.random.normal(kx, (B, S, FEAT), jnp.float32)
    str_mat = jax.random.normal(ks, (B, 1, S, S), jnp.float32)
    # mask: 1.0 = keep, 0.0 = masked; ensure each row keeps at least one entry
    attn_mask = (jax.random.uniform(km, (B, 1, S, S)) > 0.3).astype(jnp.float32)
    attn_mask = attn_mask.at[..., 0].set(1.0)

    fwd = jax.jit(functools.partial(mh_inr_attn_forward, n_head=N_HEAD))
    y = fwd(prepared, x, str_mat, attn_mask)
    y = jax.block_until_ready(y)

    y_ref = reference_forward(params, x, str_mat, attn_mask, N_HEAD)
    assert y.shape == (B, S, FEAT)
    # bf16 MXU inputs + approx reciprocal => compare against f32 ref with a
    # correspondingly loose tolerance.
    assert jnp.allclose(y, y_ref, atol=5e-2, rtol=5e-2), "mismatch vs reference"

    print("KERNEL_OK")
</pallas_src>

<mosaic_0001>
module attributes {stable_mosaic.version = 11 : i64} {
  func.func @_linear_kernel(%arg0: i32, %arg1: i32, %arg2: i32, %arg3: memref<16x32xbf16, #tpu.memory_space<vmem>>, %arg4: memref<32x96xbf16, #tpu.memory_space<vmem>>, %arg5: memref<1x96xf32, #tpu.memory_space<vmem>>, %arg6: memref<16x96xbf16, #tpu.memory_space<vmem>>, %arg7: memref<16x96xf32, #tpu.memory_space<vmem>>) attributes {dimension_semantics = [#tpu.dimension_semantics<parallel>, #tpu.dimension_semantics<parallel>, #tpu.dimension_semantics<arbitrary>], iteration_bounds = array<i64: 1, 1, 1>, scalar_prefetch = 0 : i64, scratch_operands = 1 : i64, tpu.core_type = #tpu.core_type<tc>, window_params = [{transform_indices = @transform_0, window_bounds = array<i64: 16, 32>}, {transform_indices = @transform_1, window_bounds = array<i64: 32, 96>}, {transform_indices = @transform_2, window_bounds = array<i64: 1, 96>}, {transform_indices = @transform_3, window_bounds = array<i64: 16, 96>}]} {
    %c0_i32 = arith.constant 0 : i32
    %0 = arith.cmpi eq, %arg2, %c0_i32 : i32
    %1 = arith.extui %0 : i1 to i32
    %c0_i32_0 = arith.constant 0 : i32
    %2 = arith.cmpi ne, %1, %c0_i32_0 : i32
    scf.if %2 {
      %cst_10 = arith.constant 0.000000e+00 : f32
      %12 = vector.broadcast %cst_10 : f32 to vector<16x96xf32>
      %c0_11 = arith.constant 0 : index
      %c0_12 = arith.constant 0 : index
      %13 = vector.load %arg7[%c0_11, %c0_12] : memref<16x96xf32, #tpu.memory_space<vmem>>, vector<16x96xf32>
      tpu.vector_store %arg7[%c0_11, %c0_12], %12 {strides = array<i32>} : memref<16x96xf32, #tpu.memory_space<vmem>>, vector<16x96xf32>,
    } else {
    }
    %c0 = arith.constant 0 : index
    %c0_1 = arith.constant 0 : index
    %3 = vector.load %arg7[%c0, %c0_1] : memref<16x96xf32, #tpu.memory_space<vmem>>, vector<16x96xf32>
    %c0_2 = arith.constant 0 : index
    %c0_3 = arith.constant 0 : index
    %4 = vector.load %arg3[%c0_2, %c0_3] : memref<16x32xbf16, #tpu.memory_space<vmem>>, vector<16x32xbf16>
    %c0_4 = arith.constant 0 : index
    %c0_5 = arith.constant 0 : index
    %5 = vector.load %arg4[%c0_4, %c0_5] : memref<32x96xbf16, #tpu.memory_space<vmem>>, vector<32x96xbf16>
    %cst = arith.constant dense<0.000000e+00> : vector<16x96xf32>
    %6 = tpu.matmul %4, %5, %cst {dimension_numbers = #tpu.dot_dimension_numbers<[1], [0], [0], [1], [0, 0, 1, 1], [], []>} : vector<16x32xbf16>, vector<32x96xbf16>, vector<16x96xf32> -> vector<16x96xf32>
    %7 = arith.addf %3, %6 : vector<16x96xf32>
    %c0_6 = arith.constant 0 : index
    %c0_7 = arith.constant 0 : index
    %8 = vector.load %arg7[%c0_6, %c0_7] : memref<16x96xf32, #tpu.memory_space<vmem>>, vector<16x96xf32>
    tpu.vector_store %arg7[%c0_6, %c0_7], %7 {strides = array<i32>} : memref<16x96xf32, #tpu.memory_space<vmem>>, vector<16x96xf32>,
    %c0_i32_8 = arith.constant 0 : i32
    %9 = arith.cmpi eq, %arg2, %c0_i32_8 : i32
    %10 = arith.extui %9 : i1 to i32
    %c0_i32_9 = arith.constant 0 : i32
    %11 = arith.cmpi ne, %10, %c0_i32_9 : i32
    scf.if %11 {
      %c0_10 = arith.constant 0 : index
      %c0_11 = arith.constant 0 : index
      %12 = vector.load %arg7[%c0_10, %c0_11] : memref<16x96xf32, #tpu.memory_space<vmem>>, vector<16x96xf32>
      %c0_12 = arith.constant 0 : index
      %c0_13 = arith.constant 0 : index
      %13 = vector.load %arg5[%c0_12, %c0_13] : memref<1x96xf32, #tpu.memory_space<vmem>>, vector<1x96xf32>
      %14 = vector.broadcast %13 : vector<1x96xf32> to vector<16x96xf32>
      %15 = arith.addf %12, %14 : vector<16x96xf32>
      %16 = arith.truncf %15 : vector<16x96xf32> to vector<16x96xbf16>
      %c0_14 = arith.constant 0 : index
      %c0_15 = arith.constant 0 : index
      %17 = vector.load %arg6[%c0_14, %c0_15] : memref<16x96xbf16, #tpu.memory_space<vmem>>, vector<16x96xbf16>
      tpu.vector_store %arg6[%c0_14, %c0_15], %16 {strides = array<i32>} : memref<16x96xbf16, #tpu.memory_space<vmem>>, vector<16x96xbf16>,
    } else {
    }
    return
  }
  func.func @transform_0(%arg0: i32, %arg1: i32, %arg2: i32) -> (i32, i32) {
    %c0_i32 = arith.constant 0 : i32
    return %arg0, %arg2 : i32, i32
  }
  func.func @transform_1(%arg0: i32, %arg1: i32, %arg2: i32) -> (i32, i32) {
    %c0_i32 = arith.constant 0 : i32
    return %arg2, %arg1 : i32, i32
  }
  func.func @transform_2(%arg0: i32, %arg1: i32, %arg2: i32) -> (i32, i32) {
    %c0_i32 = arith.constant 0 : i32
    %c0_i32_0 = arith.constant 0 : i32
    return %c0_i32, %arg1 : i32, i32
  }
  func.func @transform_3(%arg0: i32, %arg1: i32, %arg2: i32) -> (i32, i32) {
    %c0_i32 = arith.constant 0 : i32
    return %arg0, %arg1 : i32, i32
  }
}

module attributes {stable_mosaic.version = 11 : i64} {
  func.func @_attn_kernel(%arg0: i32, %arg1: memref<1x4x8x8xbf16, #tpu.memory_space<vmem>>, %arg2: memref<1x4x8x8xbf16, #tpu.memory_space<vmem>>, %arg3: memref<1x4x8x8xbf16, #tpu.memory_space<vmem>>, %arg4: memref<1x1x8x8xf32, #tpu.memory_space<vmem>>, %arg5: memref<1x1x8x8xf32, #tpu.memory_space<vmem>>, %arg6: memref<32x32xbf16, #tpu.memory_space<vmem>>, %arg7: memref<1x32xf32, #tpu.memory_space<vmem>>, %arg8: memref<1x8x32xf32, #tpu.memory_space<vmem>>) attributes {dimension_semantics = [#tpu.dimension_semantics<parallel>], iteration_bounds = array<i64: 2>, scalar_prefetch = 0 : i64, scratch_operands = 0 : i64, tpu.core_type = #tpu.core_type<tc>, window_params = [{transform_indices = @transform_0, window_bounds = array<i64: 1, 4, 8, 8>}, {transform_indices = @transform_1, window_bounds = array<i64: 1, 4, 8, 8>}, {transform_indices = @transform_2, window_bounds = array<i64: 1, 4, 8, 8>}, {transform_indices = @transform_3, window_bounds = array<i64: 1, 1, 8, 8>}, {transform_indices = @transform_4, window_bounds = array<i64: 1, 1, 8, 8>}, {pipeline_mode = #tpu.pipeline_mode<synchronous>, transform_indices = @transform_5, window_bounds = array<i64: 32, 32>}, {pipeline_mode = #tpu.pipeline_mode<synchronous>, transform_indices = @transform_6, window_bounds = array<i64: 1, 32>}, {transform_indices = @transform_7, window_bounds = array<i64: 1, 8, 32>}]} {
    %c0 = arith.constant 0 : index
    %c0_0 = arith.constant 0 : index
    %c0_1 = arith.constant 0 : index
    %c0_2 = arith.constant 0 : index
    %0 = vector.load %arg5[%c0, %c0_0, %c0_1, %c0_2] : memref<1x1x8x8xf32, #tpu.memory_space<vmem>>, vector<1x1x8x8xf32>
    %1 = vector.shape_cast %0 : vector<1x1x8x8xf32> to vector<8x8xf32>
    %cst = arith.constant 0.000000e+00 : f32
    %2 = vector.broadcast %cst : f32 to vector<8x8xf32>
    %3 = arith.cmpf oeq, %1, %2 : vector<8x8xf32>
    %c0_3 = arith.constant 0 : index
    %c0_4 = arith.constant 0 : index
    %c0_5 = arith.constant 0 : index
    %c0_6 = arith.constant 0 : index
    %4 = vector.load %arg4[%c0_3, %c0_4, %c0_5, %c0_6] : memref<1x1x8x8xf32, #tpu.memory_space<vmem>>, vector<1x1x8x8xf32>
    %5 = vector.shape_cast %4 : vector<1x1x8x8xf32> to vector<8x8xf32>
    %cst_7 = arith.constant -1.000000e+09 : f32
    %6 = vector.broadcast %cst_7 : f32 to vector<8x8xf32>
    %7 = arith.select %3, %6, %5 : vector<8x8xi1>, vector<8x8xf32>
    %cst_8 = arith.constant dense<0xFF800000> : vector<8xf32>
    %8 = vector.multi_reduction <maximumf>, %7, %cst_8 [1] : vector<8x8xf32> to vector<8xf32>
    %9 = vector.shape_cast %8 : vector<8xf32> to vector<8x1xf32>
    %10 = vector.broadcast %9 : vector<8x1xf32> to vector<8x8xf32>
    %11 = arith.subf %7, %10 : vector<8x8xf32>
    %12 = math.exp %11 : vector<8x8xf32>
    %cst_9 = arith.constant dense<0.000000e+00> : vector<8xf32>
    %13 = vector.multi_reduction <add>, %12, %cst_9 [1] : vector<8x8xf32> to vector<8xf32>
    %14 = vector.shape_cast %13 : vector<8xf32> to vector<8x1xf32>
    %15 = tpu.reciprocal %14 {approx = true} : vector<8x1xf32> -> vector<8x1xf32>
    %16 = vector.broadcast %15 : vector<8x1xf32> to vector<8x8xf32>
    %17 = arith.mulf %12, %16 : vector<8x8xf32>
    %c0_10 = arith.constant 0 : index
    %c0_11 = arith.constant 0 : index
    %c0_12 = arith.constant 0 : index
    %c0_13 = arith.constant 0 : index
    %18 = vector.load %arg1[%c0_10, %c0_11, %c0_12, %c0_13] : memref<1x4x8x8xbf16, #tpu.memory_space<vmem>>, vector<1x1x8x8xbf16>
    %19 = vector.shape_cast %18 : vector<1x1x8x8xbf16> to vector<8x8xbf16>
    %c0_14 = arith.constant 0 : index
    %c0_15 = arith.constant 0 : index
    %c0_16 = arith.constant 0 : index
    %c0_17 = arith.constant 0 : index
    %20 = vector.load %arg2[%c0_14, %c0_15, %c0_16, %c0_17] : memref<1x4x8x8xbf16, #tpu.memory_space<vmem>>, vector<1x1x8x8xbf16>
    %21 = vector.shape_cast %20 : vector<1x1x8x8xbf16> to vector<8x8xbf16>
    %c0_18 = arith.constant 0 : index
    %c0_19 = arith.constant 0 : index
    %c0_20 = arith.constant 0 : index
    %c0_21 = arith.constant 0 : index
    %22 = vector.load %arg3[%c0_18, %c0_19, %c0_20, %c0_21] : memref<1x4x8x8xbf16, #tpu.memory_space<vmem>>, vector<1x1x8x8xbf16>
    %23 = vector.shape_cast %22 : vector<1x1x8x8xbf16> to vector<8x8xbf16>
    %cst_22 = arith.constant dense<0.000000e+00> : vector<8x8xf32>
    %24 = tpu.matmul %19, %21, %cst_22 {dimension_numbers = #tpu.dot_dimension_numbers<[1], [1], [0], [0], [0, 0, 1, 0], [], []>} : vector<8x8xbf16>, vector<8x8xbf16>, vector<8x8xf32> -> vector<8x8xf32>
    %cst_23 = arith.constant 1.250000e-01 : f32
    %25 = vector.broadcast %cst_23 : f32 to vector<8x8xf32>
    %26 = arith.mulf %24, %25 : vector<8x8xf32>
    %27 = arith.addf %26, %17 : vector<8x8xf32>
    %cst_24 = arith.constant dense<0xFF800000> : vector<8xf32>
    %28 = vector.multi_reduction <maximumf>, %27, %cst_24 [1] : vector<8x8xf32> to vector<8xf32>
    %29 = vector.shape_cast %28 : vector<8xf32> to vector<8x1xf32>
    %30 = vector.broadcast %29 : vector<8x1xf32> to vector<8x8xf32>
    %31 = arith.subf %27, %30 : vector<8x8xf32>
    %32 = math.exp %31 : vector<8x8xf32>
    %cst_25 = arith.constant dense<0.000000e+00> : vector<8xf32>
    %33 = vector.multi_reduction <add>, %32, %cst_25 [1] : vector<8x8xf32> to vector<8xf32>
    %34 = vector.shape_cast %33 : vector<8xf32> to vector<8x1xf32>
    %35 = tpu.reciprocal %34 {approx = true} : vector<8x1xf32> -> vector<8x1xf32>
    %36 = vector.broadcast %35 : vector<8x1xf32> to vector<8x8xf32>
    %37 = arith.mulf %32, %36 : vector<8x8xf32>
    %38 = arith.truncf %37 : vector<8x8xf32> to vector<8x8xbf16>
    %cst_26 = arith.constant dense<0.000000e+00> : vector<8x8xf32>
    %39 = tpu.matmul %38, %23, %cst_26 {dimension_numbers = #tpu.dot_dimension_numbers<[1], [0], [0], [1], [0, 0, 1, 1], [], []>} : vector<8x8xbf16>, vector<8x8xbf16>, vector<8x8xf32> -> vector<8x8xf32>
    %c0_27 = arith.constant 0 : index
    %c1 = arith.constant 1 : index
    %c0_28 = arith.constant 0 : index
    %c0_29 = arith.constant 0 : index
    %40 = vector.load %arg1[%c0_27, %c1, %c0_28, %c0_29] : memref<1x4x8x8xbf16, #tpu.memory_space<vmem>>, vector<1x1x8x8xbf16>
    %41 = vector.shape_cast %40 : vector<1x1x8x8xbf16> to vector<8x8xbf16>
    %c0_30 = arith.constant 0 : index
    %c1_31 = arith.constant 1 : index
    %c0_32 = arith.constant 0 : index
    %c0_33 = arith.constant 0 : index
    %42 = vector.load %arg2[%c0_30, %c1_31, %c0_32, %c0_33] : memref<1x4x8x8xbf16, #tpu.memory_space<vmem>>, vector<1x1x8x8xbf16>
    %43 = vector.shape_cast %42 : vector<1x1x8x8xbf16> to vector<8x8xbf16>
    %c0_34 = arith.constant 0 : index
    %c1_35 = arith.constant 1 : index
    %c0_36 = arith.constant 0 : index
    %c0_37 = arith.constant 0 : index
    %44 = vector.load %arg3[%c0_34, %c1_35, %c0_36, %c0_37] : memref<1x4x8x8xbf16, #tpu.memory_space<vmem>>, vector<1x1x8x8xbf16>
    %45 = vector.shape_cast %44 : vector<1x1x8x8xbf16> to vector<8x8xbf16>
    %cst_38 = arith.constant dense<0.000000e+00> : vector<8x8xf32>
    %46 = tpu.matmul %41, %43, %cst_38 {dimension_numbers = #tpu.dot_dimension_numbers<[1], [1], [0], [0], [0, 0, 1, 0], [], []>} : vector<8x8xbf16>, vector<8x8xbf16>, vector<8x8xf32> -> vector<8x8xf32>
    %cst_39 = arith.constant 1.250000e-01 : f32
    %47 = vector.broadcast %cst_39 : f32 to vector<8x8xf32>
    %48 = arith.mulf %46, %47 : vector<8x8xf32>
    %49 = arith.addf %48, %17 : vector<8x8xf32>
    %cst_40 = arith.constant dense<0xFF800000> : vector<8xf32>
    %50 = vector.multi_reduction <maximumf>, %49, %cst_40 [1] : vector<8x8xf32> to vector<8xf32>
    %51 = vector.shape_cast %50 : vector<8xf32> to vector<8x1xf32>
    %52 = vector.broadcast %51 : vector<8x1xf32> to vector<8x8xf32>
    %53 = arith.subf %49, %52 : vector<8x8xf32>
    %54 = math.exp %53 : vector<8x8xf32>
    %cst_41 = arith.constant dense<0.000000e+00> : vector<8xf32>
    %55 = vector.multi_reduction <add>, %54, %cst_41 [1] : vector<8x8xf32> to vector<8xf32>
    %56 = vector.shape_cast %55 : vector<8xf32> to vector<8x1xf32>
    %57 = tpu.reciprocal %56 {approx = true} : vector<8x1xf32> -> vector<8x1xf32>
    %58 = vector.broadcast %57 : vector<8x1xf32> to vector<8x8xf32>
    %59 = arith.mulf %54, %58 : vector<8x8xf32>
    %60 = arith.truncf %59 : vector<8x8xf32> to vector<8x8xbf16>
    %cst_42 = arith.constant dense<0.000000e+00> : vector<8x8xf32>
    %61 = tpu.matmul %60, %45, %cst_42 {dimension_numbers = #tpu.dot_dimension_numbers<[1], [0], [0], [1], [0, 0, 1, 1], [], []>} : vector<8x8xbf16>, vector<8x8xbf16>, vector<8x8xf32> -> vector<8x8xf32>
    %c0_43 = arith.constant 0 : index
    %c2 = arith.constant 2 : index
    %c0_44 = arith.constant 0 : index
    %c0_45 = arith.constant 0 : index
    %62 = vector.load %arg1[%c0_43, %c2, %c0_44, %c0_45] : memref<1x4x8x8xbf16, #tpu.memory_space<vmem>>, vector<1x1x8x8xbf16>
    %63 = vector.shape_cast %62 : vector<1x1x8x8xbf16> to vector<8x8xbf16>
    %c0_46 = arith.constant 0 : index
    %c2_47 = arith.constant 2 : index
    %c0_48 = arith.constant 0 : index
    %c0_49 = arith.constant 0 : index
    %64 = vector.load %arg2[%c0_46, %c2_47, %c0_48, %c0_49] : memref<1x4x8x8xbf16, #tpu.memory_space<vmem>>, vector<1x1x8x8xbf16>
    %65 = vector.shape_cast %64 : vector<1x1x8x8xbf16> to vector<8x8xbf16>
    %c0_50 = arith.constant 0 : index
    %c2_51 = arith.constant 2 : index
    %c0_52 = arith.constant 0 : index
    %c0_53 = arith.constant 0 : index
    %66 = vector.load %arg3[%c0_50, %c2_51, %c0_52, %c0_53] : memref<1x4x8x8xbf16, #tpu.memory_space<vmem>>, vector<1x1x8x8xbf16>
    %67 = vector.shape_cast %66 : vector<1x1x8x8xbf16> to vector<8x8xbf16>
    %cst_54 = arith.constant dense<0.000000e+00> : vector<8x8xf32>
    %68 = tpu.matmul %63, %65, %cst_54 {dimension_numbers = #tpu.dot_dimension_numbers<[1], [1], [0], [0], [0, 0, 1, 0], [], []>} : vector<8x8xbf16>, vector<8x8xbf16>, vector<8x8xf32> -> vector<8x8xf32>
    %cst_55 = arith.constant 1.250000e-01 : f32
    %69 = vector.broadcast %cst_55 : f32 to vector<8x8xf32>
    %70 = arith.mulf %68, %69 : vector<8x8xf32>
    %71 = arith.addf %70, %17 : vector<8x8xf32>
    %cst_56 = arith.constant dense<0xFF800000> : vector<8xf32>
    %72 = vector.multi_reduction <maximumf>, %71, %cst_56 [1] : vector<8x8xf32> to vector<8xf32>
    %73 = vector.shape_cast %72 : vector<8xf32> to vector<8x1xf32>
    %74 = vector.broadcast %73 : vector<8x1xf32> to vector<8x8xf32>
    %75 = arith.subf %71, %74 : vector<8x8xf32>
    %76 = math.exp %75 : vector<8x8xf32>
    %cst_57 = arith.constant dense<0.000000e+00> : vector<8xf32>
    %77 = vector.multi_reduction <add>, %76, %cst_57 [1] : vector<8x8xf32> to vector<8xf32>
    %78 = vector.shape_cast %77 : vector<8xf32> to vector<8x1xf32>
    %79 = tpu.reciprocal %78 {approx = true} : vector<8x1xf32> -> vector<8x1xf32>
    %80 = vector.broadcast %79 : vector<8x1xf32> to vector<8x8xf32>
    %81 = arith.mulf %76, %80 : vector<8x8xf32>
    %82 = arith.truncf %81 : vector<8x8xf32> to vector<8x8xbf16>
    %cst_58 = arith.constant dense<0.000000e+00> : vector<8x8xf32>
    %83 = tpu.matmul %82, %67, %cst_58 {dimension_numbers = #tpu.dot_dimension_numbers<[1], [0], [0], [1], [0, 0, 1, 1], [], []>} : vector<8x8xbf16>, vector<8x8xbf16>, vector<8x8xf32> -> vector<8x8xf32>
    %c0_59 = arith.constant 0 : index
    %c3 = arith.constant 3 : index
    %c0_60 = arith.constant 0 : index
    %c0_61 = arith.constant 0 : index
    %84 = vector.load %arg1[%c0_59, %c3, %c0_60, %c0_61] : memref<1x4x8x8xbf16, #tpu.memory_space<vmem>>, vector<1x1x8x8xbf16>
    %85 = vector.shape_cast %84 : vector<1x1x8x8xbf16> to vector<8x8xbf16>
    %c0_62 = arith.constant 0 : index
    %c3_63 = arith.constant 3 : index
    %c0_64 = arith.constant 0 : index
    %c0_65 = arith.constant 0 : index
    %86 = vector.load %arg2[%c0_62, %c3_63, %c0_64, %c0_65] : memref<1x4x8x8xbf16, #tpu.memory_space<vmem>>, vector<1x1x8x8xbf16>
    %87 = vector.shape_cast %86 : vector<1x1x8x8xbf16> to vector<8x8xbf16>
    %c0_66 = arith.constant 0 : index
    %c3_67 = arith.constant 3 : index
    %c0_68 = arith.constant 0 : index
    %c0_69 = arith.constant 0 : index
    %88 = vector.load %arg3[%c0_66, %c3_67, %c0_68, %c0_69] : memref<1x4x8x8xbf16, #tpu.memory_space<vmem>>, vector<1x1x8x8xbf16>
    %89 = vector.shape_cast %88 : vector<1x1x8x8xbf16> to vector<8x8xbf16>
    %cst_70 = arith.constant dense<0.000000e+00> : vector<8x8xf32>
    %90 = tpu.matmul %85, %87, %cst_70 {dimension_numbers = #tpu.dot_dimension_numbers<[1], [1], [0], [0], [0, 0, 1, 0], [], []>} : vector<8x8xbf16>, vector<8x8xbf16>, vector<8x8xf32> -> vector<8x8xf32>
    %cst_71 = arith.constant 1.250000e-01 : f32
    %91 = vector.broadcast %cst_71 : f32 to vector<8x8xf32>
    %92 = arith.mulf %90, %91 : vector<8x8xf32>
    %93 = arith.addf %92, %17 : vector<8x8xf32>
    %cst_72 = arith.constant dense<0xFF800000> : vector<8xf32>
    %94 = vector.multi_reduction <maximumf>, %93, %cst_72 [1] : vector<8x8xf32> to vector<8xf32>
    %95 = vector.shape_cast %94 : vector<8xf32> to vector<8x1xf32>
    %96 = vector.broadcast %95 : vector<8x1xf32> to vector<8x8xf32>
    %97 = arith.subf %93, %96 : vector<8x8xf32>
    %98 = math.exp %97 : vector<8x8xf32>
    %cst_73 = arith.constant dense<0.000000e+00> : vector<8xf32>
    %99 = vector.multi_reduction <add>, %98, %cst_73 [1] : vector<8x8xf32> to vector<8xf32>
    %100 = vector.shape_cast %99 : vector<8xf32> to vector<8x1xf32>
    %101 = tpu.reciprocal %100 {approx = true} : vector<8x1xf32> -> vector<8x1xf32>
    %102 = vector.broadcast %101 : vector<8x1xf32> to vector<8x8xf32>
    %103 = arith.mulf %98, %102 : vector<8x8xf32>
    %104 = arith.truncf %103 : vector<8x8xf32> to vector<8x8xbf16>
    %cst_74 = arith.constant dense<0.000000e+00> : vector<8x8xf32>
    %105 = tpu.matmul %104, %89, %cst_74 {dimension_numbers = #tpu.dot_dimension_numbers<[1], [0], [0], [1], [0, 0, 1, 1], [], []>} : vector<8x8xbf16>, vector<8x8xbf16>, vector<8x8xf32> -> vector<8x8xf32>
    %106 = tpu.concatenate %39, %61, %83, %105 in 1 : vector<8x8xf32>, vector<8x8xf32>, vector<8x8xf32>, vector<8x8xf32> -> vector<8x32xf32>
    %107 = arith.truncf %106 : vector<8x32xf32> to vector<8x32xbf16>
    %c0_75 = arith.constant 0 : index
    %c0_76 = arith.constant 0 : index
    %108 = vector.load %arg6[%c0_75, %c0_76] : memref<32x32xbf16, #tpu.memory_space<vmem>>, vector<32x32xbf16>
    %cst_77 = arith.constant dense<0.000000e+00> : vector<8x32xf32>
    %109 = tpu.matmul %107, %108, %cst_77 {dimension_numbers = #tpu.dot_dimension_numbers<[1], [0], [0], [1], [0, 0, 1, 1], [], []>} : vector<8x32xbf16>, vector<32x32xbf16>, vector<8x32xf32> -> vector<8x32xf32>
    %c0_78 = arith.constant 0 : index
    %c0_79 = arith.constant 0 : index
    %110 = vector.load %arg7[%c0_78, %c0_79] : memref<1x32xf32, #tpu.memory_space<vmem>>, vector<1x32xf32>
    %111 = vector.broadcast %110 : vector<1x32xf32> to vector<8x32xf32>
    %112 = arith.addf %109, %111 : vector<8x32xf32>
    %c0_80 = arith.constant 0 : index
    %c0_81 = arith.constant 0 : index
    %c0_82 = arith.constant 0 : index
    %113 = vector.load %arg8[%c0_80, %c0_81, %c0_82] : memref<1x8x32xf32, #tpu.memory_space<vmem>>, vector<1x8x32xf32>
    %114 = vector.shape_cast %113 : vector<1x8x32xf32> to vector<8x32xf32>
    %115 = vector.shape_cast %112 : vector<8x32xf32> to vector<1x8x32xf32>
    tpu.vector_store %arg8[%c0_80, %c0_81, %c0_82], %115 {strides = array<i32>} : memref<1x8x32xf32, #tpu.memory_space<vmem>>, vector<1x8x32xf32>,
    return
  }
  func.func @transform_0(%arg0: i32) -> (i32, i32, i32, i32) {
    %c0_i32 = arith.constant 0 : i32
    %c0_i32_0 = arith.constant 0 : i32
    %c0_i32_1 = arith.constant 0 : i32
    %c0_i32_2 = arith.constant 0 : i32
    return %arg0, %c0_i32, %c0_i32_0, %c0_i32_1 : i32, i32, i32, i32
  }
  func.func @transform_1(%arg0: i32) -> (i32, i32, i32, i32) {
    %c0_i32 = arith.constant 0 : i32
    %c0_i32_0 = arith.constant 0 : i32
    %c0_i32_1 = arith.constant 0 : i32
    %c0_i32_2 = arith.constant 0 : i32
    return %arg0, %c0_i32, %c0_i32_0, %c0_i32_1 : i32, i32, i32, i32
  }
  func.func @transform_2(%arg0: i32) -> (i32, i32, i32, i32) {
    %c0_i32 = arith.constant 0 : i32
    %c0_i32_0 = arith.constant 0 : i32
    %c0_i32_1 = arith.constant 0 : i32
    %c0_i32_2 = arith.constant 0 : i32
    return %arg0, %c0_i32, %c0_i32_0, %c0_i32_1 : i32, i32, i32, i32
  }
  func.func @transform_3(%arg0: i32) -> (i32, i32, i32, i32) {
    %c0_i32 = arith.constant 0 : i32
    %c0_i32_0 = arith.constant 0 : i32
    %c0_i32_1 = arith.constant 0 : i32
    %c0_i32_2 = arith.constant 0 : i32
    return %arg0, %c0_i32, %c0_i32_0, %c0_i32_1 : i32, i32, i32, i32
  }
  func.func @transform_4(%arg0: i32) -> (i32, i32, i32, i32) {
    %c0_i32 = arith.constant 0 : i32
    %c0_i32_0 = arith.constant 0 : i32
    %c0_i32_1 = arith.constant 0 : i32
    %c0_i32_2 = arith.constant 0 : i32
    return %arg0, %c0_i32, %c0_i32_0, %c0_i32_1 : i32, i32, i32, i32
  }
  func.func @transform_5(%arg0: i32) -> (i32, i32) {
    %c0_i32 = arith.constant 0 : i32
    %c0_i32_0 = arith.constant 0 : i32
    %c0_i32_1 = arith.constant 0 : i32
    return %c0_i32, %c0_i32_0 : i32, i32
  }
  func.func @transform_6(%arg0: i32) -> (i32, i32) {
    %c0_i32 = arith.constant 0 : i32
    %c0_i32_0 = arith.constant 0 : i32
    %c0_i32_1 = arith.constant 0 : i32
    return %c0_i32, %c0_i32_0 : i32, i32
  }
  func.func @transform_7(%arg0: i32) -> (i32, i32, i32) {
    %c0_i32 = arith.constant 0 : i32
    %c0_i32_0 = arith.constant 0 : i32
    %c0_i32_1 = arith.constant 0 : i32
    return %arg0, %c0_i32, %c0_i32_0 : i32, i32, i32
  }
}

</mosaic_0001>

<llo_original>
// kernel: mh_inr_attn_forward.2
$region0: #{mh_inr_attn_forward.2}
  #allocation0 [shape = 'u32[]', space=smem, size = 0x4, offset = 0x4, fixed_abs, tag = 'smem constant byte address 0x4 - core index']
  #allocation1 [shape = 'u32[72,128]{1,0:T(1,128)}', space=vmem, size = 0x9000, scoped, tag = 'internal scratch']
  #allocation2 [shape = 'f32[16,96]{1,0:T(8,128)}', space=vmem, size = 0x2000, scoped, tag = 'scratch operand']
  %s0 = inlined_call_operand.vmem [shape: bf16[16,32], index: 0, kind: input, shape index: {}]
  %s1 = inlined_call_operand.vmem [shape: bf16[32,96], index: 1, kind: input, shape index: {}]
  %s2 = inlined_call_operand.vmem [shape: f32[1,96], index: 2, kind: input, shape index: {}]
  %s3 = inlined_call_operand.vmem [shape: bf16[16,96], index: 3, kind: output, shape index: {}]
  %s4 = sld [smem:[#allocation0]]
  $region30: #{mh_inr_attn_forward.2} parent=0
    _
  %s6 = ssub.s32 1, %s4
  %s7 = scalar_select 0, %s6, %s4
  // Predicated region
  $region2: #{mh_inr_attn_forward.2} parent=0 // pred_check
    _
  $region3: #{mh_inr_attn_forward.2} parent=0 // pred_check_branch
    %9 = sbr.rel (0) target = $region5
  $region4: #{mh_inr_attn_forward.2} parent=0 // pred_region
    _
  $region5: #{mh_inr_attn_forward.2} parent=0 // pred_fallthru
    _
  // Predicated region
  $region6: #{mh_inr_attn_forward.2} parent=0 // pred_check
    _
  $region7: #{mh_inr_attn_forward.2} parent=0 // pred_check_branch
    %11 = sbr.rel (0) target = $region9
  $region8: #{mh_inr_attn_forward.2} parent=0 // pred_region
    _
  $region9: #{mh_inr_attn_forward.2} parent=0 // pred_fallthru
    _
  // Predicated region
  $region10: #{mh_inr_attn_forward.2} parent=0 // pred_check
    _
  $region11: #{mh_inr_attn_forward.2} parent=0 // pred_check_branch
    %13 = sbr.rel (0) target = $region13
  $region12: #{mh_inr_attn_forward.2} parent=0 // pred_region
    _
  $region13: #{mh_inr_attn_forward.2} parent=0 // pred_fallthru
    _
  %p15 = scmp.eq.s32.totalorder 0, 0
  // Predicated region
  $region14: #{mh_inr_attn_forward.2} parent=0 // pred_check
    %p16 = pneg %p15
  $region15: #{mh_inr_attn_forward.2} parent=0 // pred_check_branch
    %18 = sbr.rel (%p16) target = $region17
  $region16: #{mh_inr_attn_forward.2} parent=0 // pred_region
    %vm19 = vcmask 785408
    %20 = vst.msk [vmem:[#allocation2] sm:$0xff] %vm19, 0.0
    %21 = vst.msk [vmem:[#allocation2 + $0x8] sm:$0xff] %vm19, 0.0
  $region17: #{mh_inr_attn_forward.2} parent=0 // pred_fallthru
    _
  %v22 = vld [vmem:[#allocation2] sm:$0xff]
  %v23 = vld [vmem:[#allocation2 + $0x8] sm:$0xff]
  %v24 = vld [vmem:[%s0] sm:$0xf]
  %v25 = vld [vmem:[%s0 + $0x4] sm:$0xf]
  %v26 = vld [vmem:[%s1] sm:$0xf]
  %v27 = vld [vmem:[%s1 + $0x4] sm:$0xf]
  %v28 = vld [vmem:[%s1 + $0x8] sm:$0xf]
  %v29 = vld [vmem:[%s1 + $0xc] sm:$0xf]
  %v32 = vunpack.c.l.b16 %v24
  %v33 = vunpack.c.l.b16 %v25
  %v34 = vpack.c.b16 %v33, %v32
  %v39 = vunpack.c.l.b16 %v26
  %v40 = vunpack.c.l.b16 %v27
  %v41 = vunpack.c.l.b16 %v28
  %v42 = vunpack.c.l.b16 %v29
  %v43 = vpack.c.b16 %v40, %v39
  %v44 = vpack.c.b16 %v42, %v41
  %vm47 = vcmask 261120
  %v49 = vsel %vm47, %v34, 0
  %51 = vmatpush.bf16.msra.mxu0 0
  %52 = vmatpush.bf16.msra.mxu0 0
  %53 = vmatpush.bf16.msra.mxu0 0
  %54 = vmatpush.bf16.msra.mxu0 0
  %55 = vmatpush.bf16.msra.mxu0 0
  %56 = vmatpush.bf16.msra.mxu0 0
  %57 = vmatpush.bf16.msra.mxu0 %v44
  %58 = vmatpush.bf16.msra.mxu0 %v43
  %59 = vmatmul.bf16.gmra.mxu0 %v49
  %v60 = vpop.f32.mrf.mxu0
  %v61 = vadd.f32 0.0, %v60
  %v62 = vpop.f32.mrf.mxu0
  %v63 = vadd.f32 0.0, %v62
  %64 = vdwg.mxu0
  %v65 = vadd.f32 %v22, %v61
  %v66 = vadd.f32 %v23, %v63
  %vm67 = vcmask 785408
  %68 = vst.msk [vmem:[#allocation2] sm:$0xff] %vm67, %v65
  %69 = vst.msk [vmem:[#allocation2 + $0x8] sm:$0xff] %vm67, %v66
  // Predicated region
  $region18: #{mh_inr_attn_forward.2} parent=0 // pred_check
    %p70 = pneg %p15
  $region19: #{mh_inr_attn_forward.2} parent=0 // pred_check_branch
    %72 = sbr.rel (%p70) target = $region21
  $region20: #{mh_inr_attn_forward.2} parent=0 // pred_region
    %v73 = vld [vmem:[#allocation2] sm:$0xff]
    %v74 = vld [vmem:[#allocation2 + $0x8] sm:$0xff]
    %v75 = vld [vmem:[%s2] sm:$0x1]
    %v77 = vperm.slane %v75, 0
    %v79 = vadd.f32 %v73, %v77
    %v80 = vadd.f32 %v74, %v77
    %v81 = vpack.c.bf16 %v79, %v79
    %v82 = vpack.c.bf16 %v80, %v80
    %vm83 = vcmask 781312
    %84 = vst.msk [vmem:[%s3] sm:$0xf] %vm83, %v81
    %85 = vst.msk [vmem:[%s3 + $0x4] sm:$0xf] %vm83, %v82
  $region21: #{mh_inr_attn_forward.2} parent=0 // pred_fallthru
    _
  // Predicated region
  $region22: #{mh_inr_attn_forward.2} parent=0 // pred_check
    _
  $region23: #{mh_inr_attn_forward.2} parent=0 // pred_check_branch
    %87 = sbr.rel (0) target = $region25
  $region24: #{mh_inr_attn_forward.2} parent=0 // pred_region
    _
  $region25: #{mh_inr_attn_forward.2} parent=0 // pred_fallthru
    _
  // Predicated region
  $region26: #{mh_inr_attn_forward.2} parent=0 // pred_check
    _
  $region27: #{mh_inr_attn_forward.2} parent=0 // pred_check_branch
    %89 = sbr.rel (0) target = $region29
  $region28: #{mh_inr_attn_forward.2} parent=0 // pred_region
    _
  $region29: #{mh_inr_attn_forward.2} parent=0 // pred_fallthru
    _

// kernel: mh_inr_attn_forward.3
$region0: #{mh_inr_attn_forward.3}
  #allocation0 [shape = 'u32[]', space=smem, size = 0x4, offset = 0x4, fixed_abs, tag = 'smem constant byte address 0x4 - core index']
  #allocation1 [shape = 'u32[72,128]{1,0:T(1,128)}', space=vmem, size = 0x9000, scoped, tag = 'internal scratch']
  %s0 = inlined_call_operand.vmem [shape: bf16[2,4,8,8], index: 0, kind: input, shape index: {}]
  %s1 = inlined_call_operand.vmem [shape: bf16[2,4,8,8], index: 1, kind: input, shape index: {}]
  %s2 = inlined_call_operand.vmem [shape: bf16[2,4,8,8], index: 2, kind: input, shape index: {}]
  %s3 = inlined_call_operand.vmem [shape: f32[2,1,8,8], index: 3, kind: input, shape index: {}]
  %s4 = inlined_call_operand.vmem [shape: f32[2,1,8,8], index: 4, kind: input, shape index: {}]
  %s5 = inlined_call_operand.vmem [shape: bf16[32,32], index: 5, kind: input, shape index: {}]
  %s6 = inlined_call_operand.vmem [shape: f32[1,32], index: 6, kind: input, shape index: {}]
  %s7 = inlined_call_operand.hbm [shape: f32[2,8,32], index: 7, kind: output, shape index: {}]
  %s8 = sld [smem:[#allocation0]]
  $region61: #{mh_inr_attn_forward.3} parent=0
    _
  %s10 = ssub.s32 1, %s8
  %s11 = scalar_select 0, %s10, %s8
  $region1: #{mh_inr_attn_forward.3} parent=0
    #allocation2 [shape = 'u8[8192]{0}', space=vmem, size = 0x2000, scoped, tag = 'output window, operand 0']
    #allocation3 [shape = 's32[2]{0}', space=sflag, size = 0x8, scoped, tag = 'scoped memory for mh_inr_attn_forward.3']
    %12 = vsyncpa [#allocation3], 0
    %s13 = scalar_lea.sflag [#allocation3], 1
    %14 = vsyncpa %s13, 0
    loop: start=0, step=1, limit=4
    $region2: #{mh_inr_attn_forward.3} parent=1 // loop_pre_header
      _
    $region3: #{mh_inr_attn_forward.3} parent=1 // loop_header
      %s16 = sphi 0, %s20
      %p17 = scmp.ge.s32.totalorder %s16, 4
      %s26 = sphi 0, %s28
      %s29 = sphi 0, %s26
      %s30 = sphi 0, %s29
      %s46 = sphi 0, %s30
      %s52 = sphi 0, %s54
      %s55 = sphi 0, %s52
      %s56 = sphi 0, %s55
      %s72 = sphi 0, %s56
      %s78 = sphi 0, %s80
      %s81 = sphi 0, %s78
      %s82 = sphi 0, %s81
      %s98 = sphi 0, %s82
      %s104 = sphi 0, %s106
      %s107 = sphi 0, %s104
      %s108 = sphi 0, %s107
      %s124 = sphi 0, %s108
      %s130 = sphi 0, %s132
      %s133 = sphi 0, %s130
      %s134 = sphi 0, %s133
      %s150 = sphi 0, %s134
      %s154 = sphi 0, %s154
      %s156 = sphi 0, %s154
      %s157 = sphi 0, %s156
      %s171 = sphi 0, %s157
      %s175 = sphi 0, %s175
      %s177 = sphi 0, %s175
      %s178 = sphi 0, %s177
      %s192 = sphi 0, %s178
      %s198 = sphi 0, %s200
      %s201 = sphi 0, %s198
      %s202 = sphi 0, %s201
      %s218 = sphi 0, %s202
    $region4: #{mh_inr_attn_forward.3} parent=1 // loop_header_branch
      %19 = sbr.rel (%p17) target = $region8
    $region5: #{mh_inr_attn_forward.3} parent=1 // loop_body
      %s21 = ssub.s32 %s16, 1
      %s22 = ssub.s32 %s16, 2
      %s23 = sadd.s32 %s16, 1
      %s24 = ssub.s32 %s16, %s23
      %p25 = scmp.eq.s32.totalorder %s24, 0
      %s27 = sadd.s32 %s26, 1
      %s28 = scalar_select %p25, %s26, %s27
      %p31 = pneg %p25
      %p32 = scmp.eq.s32.totalorder %s16, 1
      %p33 = por %p31, %p32
      %p34 = scmp.ne.s32.totalorder %s26, %s29
      %p35 = scmp.eq.s32.totalorder %s16, 0
      %p36 = por %p34, %p35
      %p37 = scmp.ne.s32.totalorder %s26, %s29
      %p38 = scmp.eq.s32.totalorder %s21, 1
      %p39 = por %p37, %p38
      %p40 = scmp.ne.s32.totalorder %s29, %s30
      %p41 = scmp.eq.s32.totalorder %s21, 0
      %p42 = por %p40, %p41
      %p43 = scmp.ne.s32.totalorder %s29, %s30
      %p44 = scmp.eq.s32.totalorder %s22, 1
      %p45 = por %p43, %p44
      %p47 = scmp.ne.s32.totalorder %s30, %s46
      %p48 = scmp.eq.s32.totalorder %s22, 0
      %p49 = por %p47, %p48
      %s50 = ssub.s32 %s16, %s23
      %p51 = scmp.eq.s32.totalorder %s50, 0
      %s53 = sadd.s32 %s52, 1
      %s54 = scalar_select %p51, %s52, %s53
      %p57 = pneg %p51
      %p58 = scmp.eq.s32.totalorder %s16, 1
      %p59 = por %p57, %p58
      %p60 = scmp.ne.s32.totalorder %s52, %s55
      %p61 = scmp.eq.s32.totalorder %s16, 0
      %p62 = por %p60, %p61
      %p63 = scmp.ne.s32.totalorder %s52, %s55
      %p64 = scmp.eq.s32.totalorder %s21, 1
      %p65 = por %p63, %p64
      %p66 = scmp.ne.s32.totalorder %s55, %s56
      %p67 = scmp.eq.s32.totalorder %s21, 0
      %p68 = por %p66, %p67
      %p69 = scmp.ne.s32.totalorder %s55, %s56
      %p70 = scmp.eq.s32.totalorder %s22, 1
      %p71 = por %p69, %p70
      %p73 = scmp.ne.s32.totalorder %s56, %s72
      %p74 = scmp.eq.s32.totalorder %s22, 0
      %p75 = por %p73, %p74
      %s76 = ssub.s32 %s16, %s23
      %p77 = scmp.eq.s32.totalorder %s76, 0
      %s79 = sadd.s32 %s78, 1
      %s80 = scalar_select %p77, %s78, %s79
      %p83 = pneg %p77
      %p84 = scmp.eq.s32.totalorder %s16, 1
      %p85 = por %p83, %p84
      %p86 = scmp.ne.s32.totalorder %s78, %s81
      %p87 = scmp.eq.s32.totalorder %s16, 0
      %p88 = por %p86, %p87
      %p89 = scmp.ne.s32.totalorder %s78, %s81
      %p90 = scmp.eq.s32.totalorder %s21, 1
      %p91 = por %p89, %p90
      %p92 = scmp.ne.s32.totalorder %s81, %s82
      %p93 = scmp.eq.s32.totalorder %s21, 0
      %p94 = por %p92, %p93
      %p95 = scmp.ne.s32.totalorder %s81, %s82
      %p96 = scmp.eq.s32.totalorder %s22, 1
      %p97 = por %p95, %p96
      %p99 = scmp.ne.s32.totalorder %s82, %s98
      %p100 = scmp.eq.s32.totalorder %s22, 0
      %p101 = por %p99, %p100
      %s102 = ssub.s32 %s16, %s23
      %p103 = scmp.eq.s32.totalorder %s102, 0
      %s105 = sadd.s32 %s104, 1
      %s106 = scalar_select %p103, %s104, %s105
      %p109 = pneg %p103
      %p110 = scmp.eq.s32.totalorder %s16, 1
      %p111 = por %p109, %p110
      %p112 = scmp.ne.s32.totalorder %s104, %s107
      %p113 = scmp.eq.s32.totalorder %s16, 0
      %p114 = por %p112, %p113
      %p115 = scmp.ne.s32.totalorder %s104, %s107
      %p116 = scmp.eq.s32.totalorder %s21, 1
      %p117 = por %p115, %p116
      %p118 = scmp.ne.s32.totalorder %s107, %s108
      %p119 = scmp.eq.s32.totalorder %s21, 0
      %p120 = por %p118, %p119
      %p121 = scmp.ne.s32.totalorder %s107, %s108
      %p122 = scmp.eq.s32.totalorder %s22, 1
      %p123 = por %p121, %p122
      %p125 = scmp.ne.s32.totalorder %s108, %s124
      %p126 = scmp.eq.s32.totalorder %s22, 0
      %p127 = por %p125, %p126
      %s128 = ssub.s32 %s16, %s23
      %p129 = scmp.eq.s32.totalorder %s128, 0
      %s131 = sadd.s32 %s130, 1
      %s132 = scalar_select %p129, %s130, %s131
      %p135 = pneg %p129
      %p136 = scmp.eq.s32.totalorder %s16, 1
      %p137 = por %p135, %p136
      %p138 = scmp.ne.s32.totalorder %s130, %s133
      %p139 = scmp.eq.s32.totalorder %s16, 0
      %p140 = por %p138, %p139
      %p141 = scmp.ne.s32.totalorder %s130, %s133
      %p142 = scmp.eq.s32.totalorder %s21, 1
      %p143 = por %p141, %p142
      %p144 = scmp.ne.s32.totalorder %s133, %s134
      %p145 = scmp.eq.s32.totalorder %s21, 0
      %p146 = por %p144, %p145
      %p147 = scmp.ne.s32.totalorder %s133, %s134
      %p148 = scmp.eq.s32.totalorder %s22, 1
      %p149 = por %p147, %p148
      %p151 = scmp.ne.s32.totalorder %s134, %s150
      %p152 = scmp.eq.s32.totalorder %s22, 0
      %p153 = por %p151, %p152
      %s155 = sadd.s32 %s154, 1
      %p158 = scmp.eq.s32.totalorder %s16, 1
      %p159 = scmp.ne.s32.totalorder %s154, %s156
      %p160 = scmp.eq.s32.totalorder %s16, 0
      %p161 = por %p159, %p160
      %p162 = scmp.ne.s32.totalorder %s154, %s156
      %p163 = scmp.eq.s32.totalorder %s21, 1
      %p164 = por %p162, %p163
      %p165 = scmp.ne.s32.totalorder %s156, %s157
      %p166 = scmp.eq.s32.totalorder %s21, 0
      %p167 = por %p165, %p166
      %p168 = scmp.ne.s32.totalorder %s156, %s157
      %p169 = scmp.eq.s32.totalorder %s22, 1
      %p170 = por %p168, %p169
      %p172 = scmp.ne.s32.totalorder %s157, %s171
      %p173 = scmp.eq.s32.totalorder %s22, 0
      %p174 = por %p172, %p173
      %s176 = sadd.s32 %s175, 1
      %p179 = scmp.eq.s32.totalorder %s16, 1
      %p180 = scmp.ne.s32.totalorder %s175, %s177
      %p181 = scmp.eq.s32.totalorder %s16, 0
      %p182 = por %p180, %p181
      %p183 = scmp.ne.s32.totalorder %s175, %s177
      %p184 = scmp.eq.s32.totalorder %s21, 1
      %p185 = por %p183, %p184
      %p186 = scmp.ne.s32.totalorder %s177, %s178
      %p187 = scmp.eq.s32.totalorder %s21, 0
      %p188 = por %p186, %p187
      %p189 = scmp.ne.s32.totalorder %s177, %s178
      %p190 = scmp.eq.s32.totalorder %s22, 1
      %p191 = por %p189, %p190
      %p193 = scmp.ne.s32.totalorder %s178, %s192
      %p194 = scmp.eq.s32.totalorder %s22, 0
      %p195 = por %p193, %p194
      %s196 = ssub.s32 %s16, %s23
      %p197 = scmp.eq.s32.totalorder %s196, 0
      %s199 = sadd.s32 %s198, 1
      %s200 = scalar_select %p197, %s198, %s199
      %p203 = pneg %p197
      %p204 = scmp.eq.s32.totalorder %s16, 1
      %p205 = por %p203, %p204
      %p206 = scmp.ne.s32.totalorder %s198, %s201
      %p207 = scmp.eq.s32.totalorder %s16, 0
      %p208 = por %p206, %p207
      %p209 = scmp.ne.s32.totalorder %s198, %s201
      %p210 = scmp.eq.s32.totalorder %s21, 1
      %p211 = por %p209, %p210
      %p212 = scmp.ne.s32.totalorder %s201, %s202
      %p213 = scmp.eq.s32.totalorder %s21, 0
      %p214 = por %p212, %p213
      %p215 = scmp.ne.s32.totalorder %s201, %s202
      %p216 = scmp.eq.s32.totalorder %s22, 1
      %p217 = por %p215, %p216
      %p219 = scmp.ne.s32.totalorder %s202, %s218
      %p220 = scmp.eq.s32.totalorder %s22, 0
      %p221 = por %p219, %p220
      %p222 = scmp.le.s32.totalorder 1, %s16
      %p223 = scmp.lt.s32.totalorder %s16, 3
      %p224 = pnand %p222, %p223
      %p225 = pneg %p224
      // Predicated region
      $region9: #{mh_inr_attn_forward.3} parent=5 // pred_check
        _
      $region10: #{mh_inr_attn_forward.3} parent=5 // pred_check_branch
        %227 = sbr.rel (%p224) target = $region12
      $region11: #{mh_inr_attn_forward.3} parent=5 // pred_region
        %s228 = ssub.s32 %s16, 1
        // Predicated region
        $region13: #{mh_inr_attn_forward.3} parent=11 // pred_check
          %p229 = pneg %p167
        $region14: #{mh_inr_attn_forward.3} parent=11 // pred_check_branch
          %231 = sbr.rel (%p229) target = $region16
        $region15: #{mh_inr_attn_forward.3} parent=11 // pred_region
          _
        $region16: #{mh_inr_attn_forward.3} parent=11 // pred_fallthru
          _
        // Predicated region
        $region17: #{mh_inr_attn_forward.3} parent=11 // pred_check
          %p232 = pneg %p188
        $region18: #{mh_inr_attn_forward.3} parent=11 // pred_check_branch
          %234 = sbr.rel (%p232) target = $region20
        $region19: #{mh_inr_attn_forward.3} parent=11 // pred_region
          _
        $region20: #{mh_inr_attn_forward.3} parent=11 // pred_fallthru
          _
      $region12: #{mh_inr_attn_forward.3} parent=5 // pred_fallthru
        _
      %p235 = scmp.lt.s32.totalorder %s16, 2
      // Predicated region
      $region21: #{mh_inr_attn_forward.3} parent=5 // pred_check
        %p236 = pneg %p235
      $region22: #{mh_inr_attn_forward.3} parent=5 // pred_check_branch
        %238 = sbr.rel (%p236) target = $region24
      $region23: #{mh_inr_attn_forward.3} parent=5 // pred_region
        // Predicated region
        $region25: #{mh_inr_attn_forward.3} parent=23 // pred_check
          %p239 = pneg %p36
        $region26: #{mh_inr_attn_forward.3} parent=23 // pred_check_branch
          %241 = sbr.rel (%p239) target = $region28
        $region27: #{mh_inr_attn_forward.3} parent=23 // pred_region
          %p242 = scmp.lt.s32.totalorder %s16, 1
          %s243 = scalar_select %p242, %s16, 1
          %s244 = smul.addr %s243, 4
          %s245 = smul.addr %s244, 4
          %s246 = scalar_lea.vmem %s0, %s245
        $region28: #{mh_inr_attn_forward.3} parent=23 // pred_fallthru
          _
        // Predicated region
        $region29: #{mh_inr_attn_forward.3} parent=23 // pred_check
          %p247 = pneg %p62
        $region30: #{mh_inr_attn_forward.3} parent=23 // pred_check_branch
          %249 = sbr.rel (%p247) target = $region32
        $region31: #{mh_inr_attn_forward.3} parent=23 // pred_region
          %p250 = scmp.lt.s32.totalorder %s16, 1
          %s251 = scalar_select %p250, %s16, 1
          %s252 = smul.addr %s251, 4
          %s253 = smul.addr %s252, 4
          %s254 = scalar_lea.vmem %s1, %s253
        $region32: #{mh_inr_attn_forward.3} parent=23 // pred_fallthru
          _
        // Predicated region
        $region33: #{mh_inr_attn_forward.3} parent=23 // pred_check
          %p255 = pneg %p88
        $region34: #{mh_inr_attn_forward.3} parent=23 // pred_check_branch
          %257 = sbr.rel (%p255) target = $region36
        $region35: #{mh_inr_attn_forward.3} parent=23 // pred_region
          %p258 = scmp.lt.s32.totalorder %s16, 1
          %s259 = scalar_select %p258, %s16, 1
          %s260 = smul.addr %s259, 4
          %s261 = smul.addr %s260, 4
          %s262 = scalar_lea.vmem %s2, %s261
        $region36: #{mh_inr_attn_forward.3} parent=23 // pred_fallthru
          _
        // Predicated region
        $region37: #{mh_inr_attn_forward.3} parent=23 // pred_check
          %p263 = pneg %p114
        $region38: #{mh_inr_attn_forward.3} parent=23 // pred_check_branch
          %265 = sbr.rel (%p263) target = $region40
        $region39: #{mh_inr_attn_forward.3} parent=23 // pred_region
          %p266 = scmp.lt.s32.totalorder %s16, 1
          %s267 = scalar_select %p266, %s16, 1
          %s268 = smul.addr %s267, 8
          %s269 = scalar_lea.vmem %s3, %s268
        $region40: #{mh_inr_attn_forward.3} parent=23 // pred_fallthru
          _
        // Predicated region
        $region41: #{mh_inr_attn_forward.3} parent=23 // pred_check
          %p270 = pneg %p140
        $region42: #{mh_inr_attn_forward.3} parent=23 // pred_check_branch
          %272 = sbr.rel (%p270) target = $region44
        $region43: #{mh_inr_attn_forward.3} parent=23 // pred_region
          %p273 = scmp.lt.s32.totalorder %s16, 1
          %s274 = scalar_select %p273, %s16, 1
          %s275 = smul.addr %s274, 8
          %s276 = scalar_lea.vmem %s4, %s275
        $region44: #{mh_inr_attn_forward.3} parent=23 // pred_fallthru
          _
      $region24: #{mh_inr_attn_forward.3} parent=5 // pred_fallthru
        _
      %p277 = scmp.le.s32.totalorder 1, %s16
      %p278 = scmp.lt.s32.totalorder %s16, 3
      %p279 = pnand %p277, %p278
      %p280 = pneg %p279
      // Predicated region
      $region45: #{mh_inr_attn_forward.3} parent=5 // pred_check
        _
      $region46: #{mh_inr_attn_forward.3} parent=5 // pred_check_branch
        %282 = sbr.rel (%p279) target = $region48
      $region47: #{mh_inr_attn_forward.3} parent=5 // pred_region
        %s283 = ssub.s32 %s16, 1
        %p284 = scmp.lt.s32.totalorder %s21, 1
        %s285 = scalar_select %p284, %s21, 1
        %s286 = smul.addr %s285, 4
        %s287 = smul.addr %s286, 4
        %s288 = scalar_lea.vmem %s0, %s287
        %p289 = pneg %p42
        %p290 = pneg %p39
        %p291 = scmp.lt.s32.totalorder %s21, 1
        %s292 = scalar_select %p291, %s21, 1
        %s293 = smul.addr %s292, 4
        %s294 = smul.addr %s293, 4
        %s295 = scalar_lea.vmem %s1, %s294
        %p296 = pneg %p68
        %p297 = pneg %p65
        %p298 = scmp.lt.s32.totalorder %s21, 1
        %s299 = scalar_select %p298, %s21, 1
        %s300 = smul.addr %s299, 4
        %s301 = smul.addr %s300, 4
        %s302 = scalar_lea.vmem %s2, %s301
        %p303 = pneg %p94
        %p304 = pneg %p91
        %p305 = scmp.lt.s32.totalorder %s21, 1
        %s306 = scalar_select %p305, %s21, 1
        %s307 = smul.addr %s306, 8
        %s308 = scalar_lea.vmem %s3, %s307
        %p309 = pneg %p120
        %p310 = pneg %p117
        %p311 = scmp.lt.s32.totalorder %s21, 1
        %s312 = scalar_select %p311, %s21, 1
        %s313 = smul.addr %s312, 8
        %s314 = scalar_lea.vmem %s4, %s313
        %p315 = pneg %p146
        %p316 = pneg %p143
        %p317 = pneg %p167
        %p318 = pneg %p164
        %p319 = pneg %p188
        %p320 = pneg %p185
        %p321 = pneg %p214
        %p322 = pneg %p211
        %s323 = sand.u32 %s201, 1
        %s324 = scalar_lea.sflag [#allocation3], %s323
        %s325 = sand.u32 %s201, 1
        %s326 = smul.addr %s325, 8
        %s327 = scalar_lea.vmem [#allocation2], %s326
        %p328 = scmp.lt.s32.totalorder %s21, 1
        %s329 = scalar_select %p328, %s21, 1
        %s330 = smul.addr %s329, 4
        %s331 = smul.addr %s330, 4
        %s332 = scalar_lea.vmem %s0, %s331
        %p333 = scmp.lt.s32.totalorder %s21, 1
        %s334 = scalar_select %p333, %s21, 1
        %s335 = smul.addr %s334, 4
        %s336 = smul.addr %s335, 4
        %s337 = scalar_lea.vmem %s1, %s336
        %p338 = scmp.lt.s32.totalorder %s21, 1
        %s339 = scalar_select %p338, %s21, 1
        %s340 = smul.addr %s339, 4
        %s341 = smul.addr %s340, 4
        %s342 = scalar_lea.vmem %s2, %s341
        %p343 = scmp.lt.s32.totalorder %s21, 1
        %s344 = scalar_select %p343, %s21, 1
        %s345 = smul.addr %s344, 8
        %s346 = scalar_lea.vmem %s3, %s345
        %p347 = scmp.lt.s32.totalorder %s21, 1
        %s348 = scalar_select %p347, %s21, 1
        %s349 = smul.addr %s348, 8
        %s350 = scalar_lea.vmem %s4, %s349
        %v352 = vld [vmem:[%s350] sm:$0xff]
        %vm353 = vcmp.eq.f32.partialorder %v352, 0.0
        %v354 = vld [vmem:[%s346] sm:$0xff]
        %v355 = vsel %vm353, -1e+09, %v354
        %vm356 = vcmask 64512
        %v357 = vsel %vm356, %v355, -inf
        %358 = vmax.xlane.f32.xlu0 %v357
        %v359 = vpop.xlane.xlu0 %358
        %v360 = vsub.f32 %v355, %v359
        %v361 = vmul.f32 %v360, 1.442695
        %v362 = vpow.pop %v361
        %v363 = vsel %vm356, %v362, 0.0
        %364 = vadd.xlane.f32.xlu0 %v363
        %v365 = vpop.xlane.xlu0 %364
        %v366 = vrcp.pop %v365
        %v367 = vmul.f32 %v362, %v366
        %v368 = vld [vmem:[%s332] sm:$0xf]
        %v369 = vld [vmem:[%s337] sm:$0xf]
        %v370 = vld [vmem:[%s342] sm:$0xf]
        %v372 = vsel %vm356, %v368, 0
        %v375 = vsel %vm356, %v369, 0
        %377 = vmatpush.bf16.xpose.msra.mxu0 0
        %378 = vmatpush.bf16.xpose.msra.mxu0 0
        %379 = vmatpush.bf16.xpose.msra.mxu0 0
        %380 = vmatpush.bf16.xpose.msra.mxu0 0
        %381 = vmatpush.bf16.xpose.msra.mxu0 0
        %382 = vmatpush.bf16.xpose.msra.mxu0 0
        %383 = vmatpush.bf16.xpose.msra.mxu0 0
        %384 = vmatpush.bf16.xpose.msra.mxu0 %v375
        %385 = vmatmul.bf16.gmra.mxu0 %v372
        %v386 = vpop.f32.mrf.mxu0
        %v387 = vadd.f32 0.0, %v386
        %v388 = vpop.f32.mrf.mxu0
        %389 = vdwg.mxu0
        %v390 = vmul.f32 %v387, 0.125
        %v391 = vadd.f32 %v390, %v367
        %v392 = vsel %vm356, %v391, -inf
        %393 = vmax.xlane.f32.xlu0 %v392
        %v394 = vpop.xlane.xlu0 %393
        %v395 = vsub.f32 %v391, %v394
        %v396 = vmul.f32 %v395, 1.442695
        %v397 = vpow.pop %v396
        %v398 = vsel %vm356, %v397, 0.0
        %399 = vadd.xlane.f32.xlu0 %v398
        %v400 = vpop.xlane.xlu0 %399
        %v401 = vrcp.pop %v400
        %v402 = vmul.f32 %v397, %v401
        %v403 = vpack.c.bf16 %v402, %v402
        %v405 = vsel %vm356, %v403, 0
        %vm407 = vcmask 1043456
        %v409 = vsel %vm407, %v370, 0
        %411 = vmatpush.bf16.msra.mxu0 0
        %412 = vmatpush.bf16.msra.mxu0 0
        %413 = vmatpush.bf16.msra.mxu0 0
        %414 = vmatpush.bf16.msra.mxu0 0
        %415 = vmatpush.bf16.msra.mxu0 0
        %416 = vmatpush.bf16.msra.mxu0 0
        %417 = vmatpush.bf16.msra.mxu0 0
        %418 = vmatpush.bf16.msra.mxu0 %v409
        %419 = vmatmul.bf16.gmra.mxu0 %v405
        %v420 = vpop.f32.mrf.mxu0
        %v421 = vadd.f32 0.0, %v420
        %v422 = vpop.f32.mrf.mxu0
        %423 = vdwg.mxu0
        %s424 = scalar_lea.vmem %s332, 4
        %v425 = vld [vmem:[%s424] sm:$0xf]
        %s426 = scalar_lea.vmem %s337, 4
        %v427 = vld [vmem:[%s426] sm:$0xf]
        %s428 = scalar_lea.vmem %s342, 4
        %v429 = vld [vmem:[%s428] sm:$0xf]
        %v431 = vsel %vm356, %v425, 0
        %v434 = vsel %vm356, %v427, 0
        %436 = vmatpush.bf16.xpose.msra.mxu0 0
        %437 = vmatpush.bf16.xpose.msra.mxu0 0
        %438 = vmatpush.bf16.xpose.msra.mxu0 0
        %439 = vmatpush.bf16.xpose.msra.mxu0 0
        %440 = vmatpush.bf16.xpose.msra.mxu0 0
        %441 = vmatpush.bf16.xpose.msra.mxu0 0
        %442 = vmatpush.bf16.xpose.msra.mxu0 0
        %443 = vmatpush.bf16.xpose.msra.mxu0 %v434
        %444 = vmatmul.bf16.gmra.mxu0 %v431
        %v445 = vpop.f32.mrf.mxu0
        %v446 = vadd.f32 0.0, %v445
        %v447 = vpop.f32.mrf.mxu0
        %448 = vdwg.mxu0
        %v449 = vmul.f32 %v446, 0.125
        %v450 = vadd.f32 %v449, %v367
        %v451 = vsel %vm356, %v450, -inf
        %452 = vmax.xlane.f32.xlu0 %v451
        %v453 = vpop.xlane.xlu0 %452
        %v454 = vsub.f32 %v450, %v453
        %v455 = vmul.f32 %v454, 1.442695
        %v456 = vpow.pop %v455
        %v457 = vsel %vm356, %v456, 0.0
        %458 = vadd.xlane.f32.xlu0 %v457
        %v459 = vpop.xlane.xlu0 %458
        %v460 = vrcp.pop %v459
        %v461 = vmul.f32 %v456, %v460
        %v462 = vpack.c.bf16 %v461, %v461
        %v464 = vsel %vm356, %v462, 0
        %v467 = vsel %vm407, %v429, 0
        %469 = vmatpush.bf16.msra.mxu0 0
        %470 = vmatpush.bf16.msra.mxu0 0
        %471 = vmatpush.bf16.msra.mxu0 0
        %472 = vmatpush.bf16.msra.mxu0 0
        %473 = vmatpush.bf16.msra.mxu0 0
        %474 = vmatpush.bf16.msra.mxu0 0
        %475 = vmatpush.bf16.msra.mxu0 0
        %476 = vmatpush.bf16.msra.mxu0 %v467
        %477 = vmatmul.bf16.gmra.mxu0 %v464
        %v478 = vpop.f32.mrf.mxu0
        %v479 = vadd.f32 0.0, %v478
        %v480 = vpop.f32.mrf.mxu0
        %481 = vdwg.mxu0
        %s482 = scalar_lea.vmem %s332, 8
        %v483 = vld [vmem:[%s482] sm:$0xf]
        %s484 = scalar_lea.vmem %s337, 8
        %v485 = vld [vmem:[%s484] sm:$0xf]
        %s486 = scalar_lea.vmem %s342, 8
        %v487 = vld [vmem:[%s486] sm:$0xf]
        %v489 = vsel %vm356, %v483, 0
        %v492 = vsel %vm356, %v485, 0
        %494 = vmatpush.bf16.xpose.msra.mxu0 0
        %495 = vmatpush.bf16.xpose.msra.mxu0 0
        %496 = vmatpush.bf16.xpose.msra.mxu0 0
        %497 = vmatpush.bf16.xpose.msra.mxu0 0
        %498 = vmatpush.bf16.xpose.msra.mxu0 0
        %499 = vmatpush.bf16.xpose.msra.mxu0 0
        %500 = vmatpush.bf16.xpose.msra.mxu0 0
        %501 = vmatpush.bf16.xpose.msra.mxu0 %v492
        %502 = vmatmul.bf16.gmra.mxu0 %v489
        %v503 = vpop.f32.mrf.mxu0
        %v504 = vadd.f32 0.0, %v503
        %v505 = vpop.f32.mrf.mxu0
        %506 = vdwg.mxu0
        %v507 = vmul.f32 %v504, 0.125
        %v508 = vadd.f32 %v507, %v367
        %v509 = vsel %vm356, %v508, -inf
        %510 = vmax.xlane.f32.xlu0 %v509
        %v511 = vpop.xlane.xlu0 %510
        %v512 = vsub.f32 %v508, %v511
        %v513 = vmul.f32 %v512, 1.442695
        %v514 = vpow.pop %v513
        %v515 = vsel %vm356, %v514, 0.0
        %516 = vadd.xlane.f32.xlu0 %v515
        %v517 = vpop.xlane.xlu0 %516
        %v518 = vrcp.pop %v517
        %v519 = vmul.f32 %v514, %v518
        %v520 = vpack.c.bf16 %v519, %v519
        %v522 = vsel %vm356, %v520, 0
        %v525 = vsel %vm407, %v487, 0
        %527 = vmatpush.bf16.msra.mxu0 0
        %528 = vmatpush.bf16.msra.mxu0 0
        %529 = vmatpush.bf16.msra.mxu0 0
        %530 = vmatpush.bf16.msra.mxu0 0
        %531 = vmatpush.bf16.msra.mxu0 0
        %532 = vmatpush.bf16.msra.mxu0 0
        %533 = vmatpush.bf16.msra.mxu0 0
        %534 = vmatpush.bf16.msra.mxu0 %v525
        %535 = vmatmul.bf16.gmra.mxu0 %v522
        %v536 = vpop.f32.mrf.mxu0
        %v537 = vadd.f32 0.0, %v536
        %v538 = vpop.f32.mrf.mxu0
        %539 = vdwg.mxu0
        %s540 = scalar_lea.vmem %s332, 12
        %v541 = vld [vmem:[%s540] sm:$0xf]
        %s542 = scalar_lea.vmem %s337, 12
        %v543 = vld [vmem:[%s542] sm:$0xf]
        %s544 = scalar_lea.vmem %s342, 12
        %v545 = vld [vmem:[%s544] sm:$0xf]
        %v547 = vsel %vm356, %v541, 0
        %v550 = vsel %vm356, %v543, 0
        %552 = vmatpush.bf16.xpose.msra.mxu0 0
        %553 = vmatpush.bf16.xpose.msra.mxu0 0
        %554 = vmatpush.bf16.xpose.msra.mxu0 0
        %555 = vmatpush.bf16.xpose.msra.mxu0 0
        %556 = vmatpush.bf16.xpose.msra.mxu0 0
        %557 = vmatpush.bf16.xpose.msra.mxu0 0
        %558 = vmatpush.bf16.xpose.msra.mxu0 0
        %559 = vmatpush.bf16.xpose.msra.mxu0 %v550
        %560 = vmatmul.bf16.gmra.mxu0 %v547
        %v561 = vpop.f32.mrf.mxu0
        %v562 = vadd.f32 0.0, %v561
        %v563 = vpop.f32.mrf.mxu0
        %564 = vdwg.mxu0
        %v565 = vmul.f32 %v562, 0.125
        %v566 = vadd.f32 %v565, %v367
        %v567 = vsel %vm356, %v566, -inf
        %568 = vmax.xlane.f32.xlu0 %v567
        %v569 = vpop.xlane.xlu0 %568
        %v570 = vsub.f32 %v566, %v569
        %v571 = vmul.f32 %v570, 1.442695
        %v572 = vpow.pop %v571
        %v573 = vsel %vm356, %v572, 0.0
        %574 = vadd.xlane.f32.xlu0 %v573
        %v575 = vpop.xlane.xlu0 %574
        %v576 = vrcp.pop %v575
        %v577 = vmul.f32 %v572, %v576
        %v578 = vpack.c.bf16 %v577, %v577
        %v580 = vsel %vm356, %v578, 0
        %v583 = vsel %vm407, %v545, 0
        %585 = vmatpush.bf16.msra.mxu0 0
        %586 = vmatpush.bf16.msra.mxu0 0
        %587 = vmatpush.bf16.msra.mxu0 0
        %588 = vmatpush.bf16.msra.mxu0 0
        %589 = vmatpush.bf16.msra.mxu0 0
        %590 = vmatpush.bf16.msra.mxu0 0
        %591 = vmatpush.bf16.msra.mxu0 0
        %592 = vmatpush.bf16.msra.mxu0 %v583
        %593 = vmatmul.bf16.gmra.mxu0 %v580
        %v594 = vpop.f32.mrf.mxu0
        %v595 = vadd.f32 0.0, %v594
        %v596 = vpop.f32.mrf.mxu0
        %597 = vdwg.mxu0
        %599 = vrot.lane.b32.xlu0 %v479, 8
        %v600 = vpop.permute.xlu0 %599
        %603 = vrot.lane.b32.xlu0 %v537, 16
        %v604 = vpop.permute.xlu0 %603
        %607 = vrot.lane.b32.xlu0 %v595, 24
        %v608 = vpop.permute.xlu0 %607
        %v610 = vsel %vm356, %v421, %v600
        %vm611 = vcmask 130048
        %v612 = vsel %vm611, %v610, %v604
        %vm613 = vcmask 195584
        %v614 = vsel %vm613, %v612, %v608
        %v615 = vpack.c.bf16 %v614, %v614
        %v616 = vld [vmem:[%s5] sm:$0xf]
        %v617 = vld [vmem:[%s5 + $0x4] sm:$0xf]
        %v618 = vld [vmem:[%s5 + $0x8] sm:$0xf]
        %v619 = vld [vmem:[%s5 + $0xc] sm:$0xf]
        %v620 = vld [vmem:[%s6] sm:$0x1]
        %v622 = vperm.slane %v620, 0
        %v628 = vunpack.c.l.b16 %v616
        %v629 = vunpack.c.l.b16 %v617
        %v630 = vunpack.c.l.b16 %v618
        %v631 = vunpack.c.l.b16 %v619
        %v632 = vpack.c.b16 %v629, %v628
        %v633 = vpack.c.b16 %v631, %v630
        %vm636 = vcmask 261120
        %v638 = vsel %vm636, %v615, 0
        %640 = vmatpush.bf16.msra.mxu0 0
        %641 = vmatpush.bf16.msra.mxu0 0
        %642 = vmatpush.bf16.msra.mxu0 0
        %643 = vmatpush.bf16.msra.mxu0 0
        %644 = vmatpush.bf16.msra.mxu0 0
        %645 = vmatpush.bf16.msra.mxu0 0
        %646 = vmatpush.bf16.msra.mxu0 %v633
        %647 = vmatpush.bf16.msra.mxu0 %v632
        %648 = vmatmul.bf16.gmra.mxu0 %v638
        %v649 = vpop.f32.mrf.mxu0
        %v650 = vadd.f32 %v622, %v649
        %v651 = vpop.f32.mrf.mxu0
        %652 = vdwg.mxu0
        %653 = vst.msk [vmem:[%s327] sm:$0xff] %vm636, %v650
        %s654 = sand.u32 %s201, 1
        %s655 = scalar_lea.sflag [#allocation3], %s654
        %s656 = sand.u32 %s201, 1
        %s657 = smul.addr %s656, 8
        %s658 = scalar_lea.vmem [#allocation2], %s657
        // Predicated region
        $region49: #{mh_inr_attn_forward.3} parent=47 // pred_check
          %p659 = pneg %p211
        $region50: #{mh_inr_attn_forward.3} parent=47 // pred_check_branch
          %661 = sbr.rel (%p659) target = $region52
        $region51: #{mh_inr_attn_forward.3} parent=47 // pred_region
          %663 = vsyncadd %s655, 0
          %s664 = smul.addr %s21, 8
          %s665 = scalar_lea.hbm %s7, %s664
          %s667 = sshll.u32 %s658, 4
          %s668 = int_to_ptr.vmem [resolvable:$true] %s667
          %s669 = sshll.u32 %s665, 4
          %s670 = int_to_ptr.hbm [resolvable:$true] %s669
          %672 = dma.vmem_to_hbm [thread:$0]  %s668, 128, %s670, %s655
        $region52: #{mh_inr_attn_forward.3} parent=47 // pred_fallthru
          _
      $region48: #{mh_inr_attn_forward.3} parent=5 // pred_fallthru
        _
      %p673 = scmp.le.s32.totalorder 2, %s16
      // Predicated region
      $region53: #{mh_inr_attn_forward.3} parent=5 // pred_check
        %p674 = pneg %p673
      $region54: #{mh_inr_attn_forward.3} parent=5 // pred_check_branch
        %676 = sbr.rel (%p674) target = $region56
      $region55: #{mh_inr_attn_forward.3} parent=5 // pred_region
        %s677 = ssub.s32 %s16, 2
        // Predicated region
        $region57: #{mh_inr_attn_forward.3} parent=55 // pred_check
          %p678 = pneg %p217
        $region58: #{mh_inr_attn_forward.3} parent=55 // pred_check_branch
          %680 = sbr.rel (%p678) target = $region60
        $region59: #{mh_inr_attn_forward.3} parent=55 // pred_region
          %s681 = sand.u32 %s202, 1
          %s682 = scalar_lea.sflag [#allocation3], %s681
          %s683 = sand.u32 %s202, 1
          %s684 = smul.addr %s683, 8
          %s685 = scalar_lea.vmem [#allocation2], %s684
          %687 = dma.done %s682, 128
        $region60: #{mh_inr_attn_forward.3} parent=55 // pred_fallthru
          _
      $region56: #{mh_inr_attn_forward.3} parent=5 // pred_fallthru
        _
    $region6: #{mh_inr_attn_forward.3} parent=1 // loop_footer
      %s20 = sadd.s32 1, %s16
    $region7: #{mh_inr_attn_forward.3} parent=1 // loop_footer_branch
      %15 = sbr.rel target = $region3
    $region8: #{mh_inr_attn_forward.3} parent=1 // loop_exit
      _
    %688 = vsyncpa [#allocation3], 1
    %s689 = scalar_lea.sflag [#allocation3], 1
    %690 = vsyncpa %s689, 1

</llo_original>
